<compile_context>
chip_gen: v6e
topology: v6e:2x2x1
jax: 0.10.0
libtpu: 0.0.40
codegen_flags: <defaults>
</compile_context>

<pallas_src>
import jax
import jax.numpy as jnp
from jax.experimental import pallas as pl
from jax.experimental.pallas import tpu as pltpu

_LANE = 128   # TPU lane width
_KC = 256     # max K-chunk (MXU contraction depth per pass)


def _tpu_vmem_capacity():
    """Physical per-core VMEM bytes; conservative 64 MiB (v7x) fallback."""
    cap = 64 << 20
    try:
        info = pltpu.get_tpu_info()
        cap = int(getattr(info, "vmem_capacity_bytes", cap))
    except Exception:
        pass
    return cap


def _make_unpool_kernel(n_chunks, kc, n_t, in_dtype, use_highest):
    precision = jax.lax.Precision.HIGHEST if use_highest else None

    def kernel(c_lo_ref, c_hi_ref, pooled_ref, spx_ref, out_ref):
        # c_lo_ref / c_hi_ref: (B * n_t,) int32 in SMEM (scalar prefetch)
        # pooled_ref: (1, C, K_pad) in_dtype
        # spx_ref:    (1, 1, T) int32
        # out_ref:    (1, C, T) float32
        C = pooled_ref.shape[1]
        T = spx_ref.shape[2]
        labels = spx_ref[0, 0, :]                                   # [T] int32

        if n_chunks == 1:
            iota = jax.lax.broadcasted_iota(jnp.int32, (kc, T), 0)
            one_hot = (labels[None, :] == iota).astype(in_dtype)
            out_ref[0] = jnp.dot(
                pooled_ref[0], one_hot,
                precision=precision,
                preferred_element_type=jnp.float32)
            return

        # Overlapping K-chunk range for this (batch, spatial-tile) grid point.
        idx = pl.program_id(0) * n_t + pl.program_id(1)
        c_lo = c_lo_ref[idx]
        c_hi = c_hi_ref[idx]

        # Base iota hoisted out of the chunk loop; per chunk only the labels
        # are shifted (scalar-vector subtract instead of iota + add slabs).
        base_iota = jax.lax.broadcasted_iota(jnp.int32, (kc, T), 0)

        # Accumulate in place into the output block (no extra VMEM acc slab).
        out_ref[0] = jnp.zeros((C, T), jnp.float32)

        def chunk_body(ci, carry):
            k0 = pl.multiple_of(ci * kc, kc)
            shifted = labels - ci * kc
            one_hot = (shifted[None, :] == base_iota).astype(in_dtype)
            out_ref[0] += jnp.dot(
                pooled_ref[0, :, pl.ds(k0, kc)], one_hot,
                precision=precision,
                preferred_element_type=jnp.float32)
            return carry

        jax.lax.fori_loop(c_lo, c_hi, chunk_body, 0)

    return kernel


def sup_pix_unpool(pooled, spx, *, tile=None):
    """pooled: [B, C, K] float; spx: [B, H, W] int -> out [B, C, H, W] float32."""
    B, C, K = pooled.shape
    Bs, H, W = spx.shape
    assert Bs == B
    HW = H * W

    # Dtype path: bf16 pooled stays bf16 (single-pass MXU; exact because the
    # one-hot is 0/1 accumulated in f32). Everything else is upcast to f32 and
    # gathered exactly with HIGHEST precision.
    if pooled.dtype == jnp.bfloat16:
        pooled_in = pooled
        use_highest = False
    else:
        pooled_in = pooled.astype(jnp.float32)
        use_highest = True
    esz = jnp.dtype(pooled_in.dtype).itemsize

    # K chunking (MXU contraction depth per pass); pad pooled with zero
    # columns so every chunk has a static size kc.
    kc = K if K <= _KC else _KC
    K_pad = -(-K // kc) * kc
    n_chunks = K_pad // kc
    if K_pad != K:
        pooled_in = jnp.pad(pooled_in, ((0, 0), (0, 0), (0, K_pad - K)))

    # ---- Generation-aware VMEM budget and tile selection. ----
    vmem_cap = _tpu_vmem_capacity()
    two_tc = vmem_cap < (100 << 20)          # 64 MiB/TC parts (v7x) have 2 TCs
    budget = int(vmem_cap * 0.70)

    def vmem_need(t):
        return (2 * C * K_pad * esz          # pooled block x2 (double-buffered)
                + 2 * t * 4                  # spx block x2
                + 2 * C * t * 4              # out block x2
                + kc * t * 4                 # base iota (int32), built once
                + kc * t * esz               # one-hot chunk
                + kc * t * 4                 # compare / broadcast temporaries
                + (2 << 20))                 # fixed slack

    hw_ceil = -(-HW // _LANE) * _LANE
    if tile is None:
        max_tile = hw_ceil
        if two_tc and B == 1 and hw_ceil >= 2 * _LANE:
            # Keep >= 2 spatial steps so both TensorCores get work at B == 1.
            # Gated on 2-TC parts: on 1-TC chips halving only adds step overhead.
            max_tile = (hw_ceil // 2 // _LANE) * _LANE
        if vmem_cap >= (100 << 20):
            candidates = (8192, 4096, 2048, 1024, 512, 256, 128)   # 128 MiB parts
        else:
            candidates = (2048, 1024, 512, 256, 128)               # v7x (64 MiB)
        tile = _LANE
        for cand in candidates:
            if cand <= max_tile and vmem_need(cand) <= budget:
                tile = cand
                break
    assert tile % _LANE == 0, "tile must be a multiple of 128 lanes"

    # Pad the flattened spatial axis with the sentinel label K (matches no
    # one-hot row -> contributes zeros), then slice the result back.
    HW_pad = -(-HW // tile) * tile
    n_t = HW_pad // tile
    spx_flat = spx.astype(jnp.int32).reshape(B, 1, HW)
    if HW_pad != HW:
        spx_flat = jnp.pad(
            spx_flat, ((0, 0), (0, 0), (0, HW_pad - HW)), constant_values=K)

    # Per-(batch, tile) overlapping K-chunk range, scalar-prefetched to SMEM.
    # Superpixel labels are spatially coherent, so a tile usually overlaps
    # only one or two K-chunks -> the kernel loops over just those.
    spx_tiles = spx_flat.reshape(B, n_t, tile)
    c_hi = jnp.clip(jnp.max(spx_tiles, axis=-1) // kc + 1, 0, n_chunks)
    c_lo = jnp.clip(jnp.min(spx_tiles, axis=-1) // kc, 0, n_chunks)
    c_lo = jnp.minimum(c_lo, c_hi)
    c_lo = c_lo.reshape(-1).astype(jnp.int32)
    c_hi = c_hi.reshape(-1).astype(jnp.int32)

    mxu_passes = 3 if use_highest else 1   # HIGHEST f32 ~ multi-pass bf16 emulation
    cost = pl.CostEstimate(
        flops=2 * mxu_passes * B * C * K_pad * HW_pad,
        transcendentals=0,
        bytes_accessed=(4 * B * C * HW_pad          # output store
                        + 4 * B * HW_pad            # labels
                        + esz * B * C * K_pad),     # pooled
    )
    vmem_limit = int(min(max(vmem_need(tile) + (4 << 20), 16 << 20),
                         int(vmem_cap * 0.75)))     # ~48 MiB cap on v7x

    kernel = _make_unpool_kernel(n_chunks, kc, n_t, pooled_in.dtype, use_highest)

    out_flat = pl.pallas_call(
        kernel,
        out_shape=jax.ShapeDtypeStruct((B, C, HW_pad), jnp.float32),
        grid_spec=pltpu.PrefetchScalarGridSpec(
            num_scalar_prefetch=2,
            # Spatial axis innermost: pooled's block index is constant across
            # t, so pooled is only re-DMA'd on batch change.
            grid=(B, n_t),
            in_specs=[
                pl.BlockSpec((1, C, K_pad), lambda b, t, clo, chi: (b, 0, 0)),
                pl.BlockSpec((1, 1, tile), lambda b, t, clo, chi: (b, 0, t)),
            ],
            out_specs=pl.BlockSpec((1, C, tile), lambda b, t, clo, chi: (b, 0, t)),
        ),
        compiler_params=pltpu.CompilerParams(
            dimension_semantics=("parallel", "parallel"),
            vmem_limit_bytes=vmem_limit,
        ),
        cost_estimate=cost,
    )(c_lo, c_hi, pooled_in, spx_flat)

    if HW_pad != HW:
        out_flat = out_flat[:, :, :HW]
    return out_flat.reshape(B, C, H, W)


if __name__ == "__main__":
    key = jax.random.PRNGKey(0)
    k1, k2, k3, k4, k5, k6 = jax.random.split(key, 6)

    # Case 1: f32 pooled, spatial size a multiple of the lane tile.
    B, C, K = 2, 4, 8
    H = W = 16
    pooled = jax.random.normal(k1, (B, C, K), dtype=jnp.float32)
    spx = jax.random.randint(k2, (B, H, W), 0, K, dtype=jnp.int32)
    out = jax.block_until_ready(sup_pix_unpool(pooled, spx))
    ref = jax.vmap(lambda p, s: p[:, s])(pooled, spx)          # [B, C, H, W]
    assert out.shape == (B, C, H, W) and out.dtype == jnp.float32
    assert jnp.allclose(out, ref, atol=1e-5), "mismatch vs reference (case 1)"

    # Case 2: non-multiple spatial size -> exercises the sentinel-padding path.
    B2, C2, K2, H2, W2 = 1, 3, 5, 10, 10
    pooled2 = jax.random.normal(k3, (B2, C2, K2), dtype=jnp.float32)
    spx2 = jax.random.randint(k4, (B2, H2, W2), 0, K2, dtype=jnp.int32)
    out2 = jax.block_until_ready(sup_pix_unpool(pooled2, spx2))
    ref2 = jax.vmap(lambda p, s: p[:, s])(pooled2, spx2)
    assert out2.shape == (B2, C2, H2, W2)
    assert jnp.allclose(out2, ref2, atol=1e-5), "mismatch vs reference (case 2)"

    # Case 3: bf16 fast path + K > 256 -> multi-chunk loop with chunk skipping.
    B3, C3, K3, H3, W3 = 1, 4, 300, 16, 16
    pooled3 = jax.random.normal(k5, (B3, C3, K3), jnp.float32).astype(jnp.bfloat16)
    spx3 = jax.random.randint(k6, (B3, H3, W3), 0, K3, dtype=jnp.int32)
    out3 = jax.block_until_ready(sup_pix_unpool(pooled3, spx3))
    ref3 = jax.vmap(lambda p, s: p[:, s])(pooled3.astype(jnp.float32), spx3)
    assert out3.shape == (B3, C3, H3, W3) and out3.dtype == jnp.float32
    assert jnp.allclose(out3, ref3, atol=1e-5), "mismatch vs reference (case 3)"

    print("KERNEL_OK")
</pallas_src>

<mosaic_0001>
module attributes {stable_mosaic.version = 11 : i64} {
  func.func @kernel(%arg0: i32, %arg1: i32, %arg2: memref<2xi32, #tpu.memory_space<smem>>, %arg3: memref<2xi32, #tpu.memory_space<smem>>, %arg4: memref<1x4x8xf32, #tpu.memory_space<vmem>>, %arg5: memref<1x1x256xi32, #tpu.memory_space<vmem>>, %arg6: memref<1x4x256xf32, #tpu.memory_space<vmem>>) attributes {dimension_semantics = [#tpu.dimension_semantics<parallel>, #tpu.dimension_semantics<parallel>], iteration_bounds = array<i64: 2, 1>, scalar_prefetch = 2 : i64, scratch_operands = 0 : i64, tpu.core_type = #tpu.core_type<tc>, window_params = [{transform_indices = @transform_0, window_bounds = array<i64: 1, 4, 8>}, {transform_indices = @transform_1, window_bounds = array<i64: 1, 1, 256>}, {transform_indices = @transform_2, window_bounds = array<i64: 1, 4, 256>}]} {
    %c0 = arith.constant 0 : index
    %c0_0 = arith.constant 0 : index
    %c0_1 = arith.constant 0 : index
    %0 = vector.load %arg5[%c0, %c0_0, %c0_1] : memref<1x1x256xi32, #tpu.memory_space<vmem>>, vector<1x1x256xi32>
    %1 = vector.shape_cast %0 : vector<1x1x256xi32> to vector<256xi32>
    %2 = tpu.iota {dimensions = array<i32: 0>} : vector<8x256xi32>
    %3 = vector.shape_cast %1 : vector<256xi32> to vector<1x256xi32>
    %4 = vector.broadcast %3 : vector<1x256xi32> to vector<8x256xi32>
    %5 = arith.cmpi eq, %4, %2 : vector<8x256xi32>
    %6 = arith.extui %5 : vector<8x256xi1> to vector<8x256xi32>
    %7 = arith.sitofp %6 : vector<8x256xi32> to vector<8x256xf32>
    %c0_2 = arith.constant 0 : index
    %c0_3 = arith.constant 0 : index
    %c0_4 = arith.constant 0 : index
    %8 = vector.load %arg4[%c0_2, %c0_3, %c0_4] : memref<1x4x8xf32, #tpu.memory_space<vmem>>, vector<1x4x8xf32>
    %9 = vector.shape_cast %8 : vector<1x4x8xf32> to vector<4x8xf32>
    %cst = arith.constant dense<0.000000e+00> : vector<4x256xf32>
    %10 = tpu.matmul %9, %7, %cst {dimension_numbers = #tpu.dot_dimension_numbers<[1], [0], [0], [1], [0, 0, 1, 1], [], []>, precision = #tpu.contract_precision<fp32>} : vector<4x8xf32>, vector<8x256xf32>, vector<4x256xf32> -> vector<4x256xf32>
    %c0_5 = arith.constant 0 : index
    %c0_6 = arith.constant 0 : index
    %c0_7 = arith.constant 0 : index
    %11 = vector.load %arg6[%c0_5, %c0_6, %c0_7] : memref<1x4x256xf32, #tpu.memory_space<vmem>>, vector<1x4x256xf32>
    %12 = vector.shape_cast %11 : vector<1x4x256xf32> to vector<4x256xf32>
    %13 = vector.shape_cast %10 : vector<4x256xf32> to vector<1x4x256xf32>
    tpu.vector_store %arg6[%c0_5, %c0_6, %c0_7], %13 {strides = array<i32>} : memref<1x4x256xf32, #tpu.memory_space<vmem>>, vector<1x4x256xf32>,
    return
  }
  func.func @transform_0(%arg0: i32, %arg1: i32, %arg2: memref<2xi32, #tpu.memory_space<smem>>, %arg3: memref<2xi32, #tpu.memory_space<smem>>) -> (i32, i32, i32) {
    %c0_i32 = arith.constant 0 : i32
    %c0_i32_0 = arith.constant 0 : i32
    %c0_i32_1 = arith.constant 0 : i32
    return %arg0, %c0_i32, %c0_i32_0 : i32, i32, i32
  }
  func.func @transform_1(%arg0: i32, %arg1: i32, %arg2: memref<2xi32, #tpu.memory_space<smem>>, %arg3: memref<2xi32, #tpu.memory_space<smem>>) -> (i32, i32, i32) {
    %c0_i32 = arith.constant 0 : i32
    %c0_i32_0 = arith.constant 0 : i32
    return %arg0, %c0_i32, %arg1 : i32, i32, i32
  }
  func.func @transform_2(%arg0: i32, %arg1: i32, %arg2: memref<2xi32, #tpu.memory_space<smem>>, %arg3: memref<2xi32, #tpu.memory_space<smem>>) -> (i32, i32, i32) {
    %c0_i32 = arith.constant 0 : i32
    %c0_i32_0 = arith.constant 0 : i32
    return %arg0, %c0_i32, %arg1 : i32, i32, i32
  }
}

</mosaic_0001>

<llo_original>
// kernel: tpu_custom_call.1
$region0: #{tpu_custom_call.1}
  #allocation0 [shape = 'u32[]', space=smem, size = 0x4, offset = 0x4, fixed_abs, tag = 'smem constant byte address 0x4 - core index']
  #allocation1 [shape = 'u32[144,128]{1,0:T(1,128)}', space=vmem, size = 0x12000, scoped, tag = 'internal scratch']
  #allocation2 [shape = 's32[1]{0}', space=sflag, size = 0x4, scoped, tag = 'scoped memory for tpu_custom_call.1']
  #allocation3 [shape = 'u8[512]{0}', space=smem, size = 0x200, scoped, tag = 'prefetched SMEM operand 0']
  #allocation4 [shape = 'u8[512]{0}', space=smem, size = 0x200, scoped, tag = 'prefetched SMEM operand 1']
  %s0 = inlined_call_operand.hbm [shape: s32[2], index: 0, kind: input, shape index: {}]
  %s1 = inlined_call_operand.vmem [shape: s32[2], index: 1, kind: input, shape index: {}]
  %s2 = inlined_call_operand.hbm [shape: f32[2,4,8], index: 2, kind: input, shape index: {}]
  %s3 = inlined_call_operand.vmem [shape: s32[2,1,256], index: 3, kind: input, shape index: {}]
  %s4 = inlined_call_operand.hbm [shape: f32[2,4,256], index: 4, kind: output, shape index: {}]
  %s5 = sld [smem:[#allocation0]]
  $region45: #{tpu_custom_call.1} parent=0
    _
  %s7 = ssub.s32 1, %s5
  %s8 = scalar_select 0, %s7, %s5
  %10 = dma.hbm_to_smem %s0, 16, [#allocation3], [#allocation2]
  %s11 = sshll.u32 %s1, 4
  %s12 = int_to_ptr.vmem [resolvable:$true] %s11
  %14 = dma.vmem_to_smem %s12, 16, [#allocation4], [#allocation2]
  %15 = dma.done [#allocation2], 32
  %16 = sfence
  $region1: #{tpu_custom_call.1} parent=0
    #allocation5 [shape = 'u8[4096]{0}', space=vmem, size = 0x1000, scoped, tag = 'input window, operand 2']
    #allocation6 [shape = 's32[2]{0}', space=sflag, size = 0x8, scoped, tag = 'scoped memory for tpu_custom_call.1']
    #allocation7 [shape = 's32[2]{0}', space=sflag, size = 0x8, scoped, tag = 'scoped memory for tpu_custom_call.1']
    #allocation8 [shape = 'u8[8192]{0}', space=vmem, size = 0x2000, scoped, tag = 'output window, operand 0']
    %17 = vsyncpa [#allocation6], 0
    %s18 = scalar_lea.sflag [#allocation6], 1
    %19 = vsyncpa %s18, 0
    %20 = vsyncpa [#allocation7], 0
    %s21 = scalar_lea.sflag [#allocation7], 1
    %22 = vsyncpa %s21, 0
    loop: start=0, step=1, limit=4
    $region2: #{tpu_custom_call.1} parent=1 // loop_pre_header
      _
    $region3: #{tpu_custom_call.1} parent=1 // loop_header
      %s24 = sphi 0, %s28
      %p25 = scmp.ge.s32.totalorder %s24, 4
      %s31 = sphi 0, %s43
      %s32 = sphi 0, %s39
      %s33 = sphi 0, %s31
      %s34 = sphi 0, %s32
      %s35 = sphi 0, %s33
      %s36 = sphi 0, %s34
      %s46 = sphi 0, %s48
      %s49 = sphi 0, %s46
      %s50 = sphi 0, %s49
      %s66 = sphi 0, %s50
      %s74 = sphi 0, %s76
      %s77 = sphi 0, %s74
      %s78 = sphi 0, %s77
      %s94 = sphi 0, %s78
      %s102 = sphi 0, %s104
      %s105 = sphi 0, %s102
      %s106 = sphi 0, %s105
      %s122 = sphi 0, %s106
    $region4: #{tpu_custom_call.1} parent=1 // loop_header_branch
      %27 = sbr.rel (%p25) target = $region8
    $region5: #{tpu_custom_call.1} parent=1 // loop_body
      %s29 = ssub.s32 %s24, 1
      %s30 = ssub.s32 %s24, 2
      %s37 = sadd.s32 1, %s32
      %p38 = scmp.ge.s32.totalorder %s37, 1
      %s39 = scalar_select %p38, 0, %s37
      %s40 = sadd.s32 1, %s31
      %s41 = scalar_select %p38, %s40, %s31
      %p42 = scmp.ge.s32.totalorder %s41, 2
      %s43 = scalar_select %p42, 0, %s41
      %s44 = ssub.s32 %s31, %s43
      %p45 = scmp.eq.s32.totalorder %s44, 0
      %s47 = sadd.s32 %s46, 1
      %s48 = scalar_select %p45, %s46, %s47
      %p51 = pneg %p45
      %p52 = scmp.eq.s32.totalorder %s24, 1
      %p53 = por %p51, %p52
      %p54 = scmp.ne.s32.totalorder %s46, %s49
      %p55 = scmp.eq.s32.totalorder %s24, 0
      %p56 = por %p54, %p55
      %p57 = scmp.ne.s32.totalorder %s46, %s49
      %p58 = scmp.eq.s32.totalorder %s29, 1
      %p59 = por %p57, %p58
      %p60 = scmp.ne.s32.totalorder %s49, %s50
      %p61 = scmp.eq.s32.totalorder %s29, 0
      %p62 = por %p60, %p61
      %p63 = scmp.ne.s32.totalorder %s49, %s50
      %p64 = scmp.eq.s32.totalorder %s30, 1
      %p65 = por %p63, %p64
      %p67 = scmp.ne.s32.totalorder %s50, %s66
      %p68 = scmp.eq.s32.totalorder %s30, 0
      %p69 = por %p67, %p68
      %s70 = ssub.s32 %s31, %s43
      %s71 = ssub.s32 %s32, %s39
      %s72 = sor.u32 %s70, %s71
      %p73 = scmp.eq.s32.totalorder %s72, 0
      %s75 = sadd.s32 %s74, 1
      %s76 = scalar_select %p73, %s74, %s75
      %p79 = pneg %p73
      %p80 = scmp.eq.s32.totalorder %s24, 1
      %p81 = por %p79, %p80
      %p82 = scmp.ne.s32.totalorder %s74, %s77
      %p83 = scmp.eq.s32.totalorder %s24, 0
      %p84 = por %p82, %p83
      %p85 = scmp.ne.s32.totalorder %s74, %s77
      %p86 = scmp.eq.s32.totalorder %s29, 1
      %p87 = por %p85, %p86
      %p88 = scmp.ne.s32.totalorder %s77, %s78
      %p89 = scmp.eq.s32.totalorder %s29, 0
      %p90 = por %p88, %p89
      %p91 = scmp.ne.s32.totalorder %s77, %s78
      %p92 = scmp.eq.s32.totalorder %s30, 1
      %p93 = por %p91, %p92
      %p95 = scmp.ne.s32.totalorder %s78, %s94
      %p96 = scmp.eq.s32.totalorder %s30, 0
      %p97 = por %p95, %p96
      %s98 = ssub.s32 %s31, %s43
      %s99 = ssub.s32 %s32, %s39
      %s100 = sor.u32 %s98, %s99
      %p101 = scmp.eq.s32.totalorder %s100, 0
      %s103 = sadd.s32 %s102, 1
      %s104 = scalar_select %p101, %s102, %s103
      %p107 = pneg %p101
      %p108 = scmp.eq.s32.totalorder %s24, 1
      %p109 = por %p107, %p108
      %p110 = scmp.ne.s32.totalorder %s102, %s105
      %p111 = scmp.eq.s32.totalorder %s24, 0
      %p112 = por %p110, %p111
      %p113 = scmp.ne.s32.totalorder %s102, %s105
      %p114 = scmp.eq.s32.totalorder %s29, 1
      %p115 = por %p113, %p114
      %p116 = scmp.ne.s32.totalorder %s105, %s106
      %p117 = scmp.eq.s32.totalorder %s29, 0
      %p118 = por %p116, %p117
      %p119 = scmp.ne.s32.totalorder %s105, %s106
      %p120 = scmp.eq.s32.totalorder %s30, 1
      %p121 = por %p119, %p120
      %p123 = scmp.ne.s32.totalorder %s106, %s122
      %p124 = scmp.eq.s32.totalorder %s30, 0
      %p125 = por %p123, %p124
      %p126 = scmp.le.s32.totalorder 1, %s24
      %p127 = scmp.lt.s32.totalorder %s24, 3
      %p128 = pnand %p126, %p127
      %p129 = pneg %p128
      // Predicated region
      $region9: #{tpu_custom_call.1} parent=5 // pred_check
        _
      $region10: #{tpu_custom_call.1} parent=5 // pred_check_branch
        %131 = sbr.rel (%p128) target = $region12
      $region11: #{tpu_custom_call.1} parent=5 // pred_region
        %s132 = ssub.s32 %s24, 1
      $region12: #{tpu_custom_call.1} parent=5 // pred_fallthru
        _
      %p133 = scmp.lt.s32.totalorder %s24, 2
      // Predicated region
      $region13: #{tpu_custom_call.1} parent=5 // pred_check
        %p134 = pneg %p133
      $region14: #{tpu_custom_call.1} parent=5 // pred_check_branch
        %136 = sbr.rel (%p134) target = $region16
      $region15: #{tpu_custom_call.1} parent=5 // pred_region
        // Predicated region
        $region17: #{tpu_custom_call.1} parent=15 // pred_check
          %p137 = pneg %p56
        $region18: #{tpu_custom_call.1} parent=15 // pred_check_branch
          %139 = sbr.rel (%p137) target = $region20
        $region19: #{tpu_custom_call.1} parent=15 // pred_region
          %s140 = sand.u32 %s46, 1
          %s141 = scalar_lea.sflag [#allocation6], %s140
          %s142 = sand.u32 %s46, 1
          %s143 = smul.addr %s142, 4
          %s144 = scalar_lea.vmem [#allocation5], %s143
          %s146 = ssub.s32 64, 64
          %147 = vsyncadd %s141, %s146
          %s148 = smul.addr %s31, 64
          %s149 = scalar_lea.hbm %s2, %s148
          %s151 = sshll.u32 %s144, 4
          %s152 = int_to_ptr.vmem [resolvable:$true] %s151
          %154 = dma.hbm_to_vmem [thread:$0]  %s149, 64, %s152, %s141
        $region20: #{tpu_custom_call.1} parent=15 // pred_fallthru
          _
        // Predicated region
        $region21: #{tpu_custom_call.1} parent=15 // pred_check
          %p155 = pneg %p84
        $region22: #{tpu_custom_call.1} parent=15 // pred_check_branch
          %157 = sbr.rel (%p155) target = $region24
        $region23: #{tpu_custom_call.1} parent=15 // pred_region
          %s158 = smul.u32 2, %s32
          %p159 = scmp.lt.s32.totalorder %s31, 1
          %s160 = scalar_select %p159, %s31, 1
          %p161 = scmp.lt.s32.totalorder %s158, 1
          %s162 = scalar_select %p161, %s158, 1
          %s163 = smul.addr %s160, 2
          %s164 = sadd.s32 %s162, %s163
          %s165 = scalar_lea.vmem %s3, %s164
          %s166 = smul.u32 2, %s32
        $region24: #{tpu_custom_call.1} parent=15 // pred_fallthru
          _
      $region16: #{tpu_custom_call.1} parent=5 // pred_fallthru
        _
      %p167 = scmp.le.s32.totalorder 1, %s24
      %p168 = scmp.lt.s32.totalorder %s24, 3
      %p169 = pnand %p167, %p168
      %p170 = pneg %p169
      // Predicated region
      $region25: #{tpu_custom_call.1} parent=5 // pred_check
        _
      $region26: #{tpu_custom_call.1} parent=5 // pred_check_branch
        %172 = sbr.rel (%p169) target = $region28
      $region27: #{tpu_custom_call.1} parent=5 // pred_region
        %s173 = ssub.s32 %s24, 1
        %s174 = sand.u32 %s49, 1
        %s175 = scalar_lea.sflag [#allocation6], %s174
        %s176 = sand.u32 %s49, 1
        %s177 = smul.addr %s176, 4
        %s178 = scalar_lea.vmem [#allocation5], %s177
        // Predicated region
        $region29: #{tpu_custom_call.1} parent=27 // pred_check
          %p179 = pneg %p62
        $region30: #{tpu_custom_call.1} parent=27 // pred_check_branch
          %181 = sbr.rel (%p179) target = $region32
        $region31: #{tpu_custom_call.1} parent=27 // pred_region
          %182 = dma.done %s175, 64
        $region32: #{tpu_custom_call.1} parent=27 // pred_fallthru
          _
        %s183 = sand.u32 %s49, 1
        %s184 = scalar_lea.sflag [#allocation6], %s183
        %s185 = sand.u32 %s49, 1
        %s186 = smul.addr %s185, 4
        %s187 = scalar_lea.vmem [#allocation5], %s186
        %p188 = pneg %p62
        %p189 = pneg %p59
        %s190 = smul.u32 2, %s34
        %p191 = scmp.lt.s32.totalorder %s33, 1
        %s192 = scalar_select %p191, %s33, 1
        %p193 = scmp.lt.s32.totalorder %s190, 1
        %s194 = scalar_select %p193, %s190, 1
        %s195 = smul.addr %s192, 2
        %s196 = sadd.s32 %s194, %s195
        %s197 = scalar_lea.vmem %s3, %s196
        %p198 = pneg %p90
        %p199 = pneg %p87
        %p200 = pneg %p118
        %p201 = pneg %p115
        %s202 = sand.u32 %s105, 1
        %s203 = scalar_lea.sflag [#allocation7], %s202
        %s204 = sand.u32 %s105, 1
        %s205 = smul.addr %s204, 8
        %s206 = scalar_lea.vmem [#allocation8], %s205
        %s207 = smul.u32 2, %s34
        %p208 = scmp.lt.s32.totalorder %s33, 1
        %s209 = scalar_select %p208, %s33, 1
        %p210 = scmp.lt.s32.totalorder %s207, 1
        %s211 = scalar_select %p210, %s207, 1
        %s212 = smul.addr %s209, 2
        %s213 = sadd.s32 %s211, %s212
        %s214 = scalar_lea.vmem %s3, %s213
        %s215 = smul.u32 2, %s34
        %s216 = smul.u32 2, %s34
        %v217 = vld [vmem:[%s214] sm:$0x3]
        %v218 = vlaneseq
        %v219 = vshrl.u32 %v218, 7
        %v220 = vlaneseq
        %v221 = vshrl.u32 %v220, 7
        %v222 = vsub.s32 0, %v221
        %v223 = vrot.slane %v217, %v222
        %v224 = vlaneseq
        %v225 = vshrl.u32 %v224, 7
        %v226 = vsub.s32 1, %v225
        %v227 = vrot.slane %v217, %v226
        %vm228 = vcmp.eq.s32.totalorder %v223, %v219
        %vm229 = vcmp.eq.s32.totalorder %v227, %v219
        %v230 = vsel %vm228, 1, 0
        %v231 = vsel %vm229, 1, 0
        %v232 = vcvt.s32.f32 %v230
        %v233 = vcvt.s32.f32 %v231
        %v234 = vld [vmem:[%s178] sm:$0xf]
        %vm235 = vcmask 64512
        %v237 = vsel %vm235, %v234, 0
        %239 = vmatprep.subr.mxu0 0.0
        %240 = vmatpush1.msra.mxu0 0.0
        %241 = vmatprep.subr.mxu0 0.0
        %242 = vmatpush1.msra.mxu0 0.0
        %243 = vmatprep.subr.mxu0 0.0
        %244 = vmatpush1.msra.mxu0 0.0
        %245 = vmatprep.subr.mxu0 0.0
        %246 = vmatpush1.msra.mxu0 0.0
        %247 = vmatprep.subr.mxu0 0.0
        %248 = vmatpush1.msra.mxu0 0.0
        %249 = vmatprep.subr.mxu0 0.0
        %250 = vmatpush1.msra.mxu0 0.0
        %251 = vmatprep.subr.mxu0 0.0
        %252 = vmatpush1.msra.mxu0 0.0
        %253 = vmatprep.subr.mxu0 0.0
        %254 = vmatpush1.msra.mxu0 0.0
        %255 = vmatprep.subr.mxu0 0.0
        %256 = vmatpush1.msra.mxu0 0.0
        %257 = vmatprep.subr.mxu0 0.0
        %258 = vmatpush1.msra.mxu0 0.0
        %259 = vmatprep.subr.mxu0 0.0
        %260 = vmatpush1.msra.mxu0 0.0
        %261 = vmatprep.subr.mxu0 0.0
        %262 = vmatpush1.msra.mxu0 0.0
        %263 = vmatprep.subr.mxu0 0.0
        %264 = vmatpush1.msra.mxu0 0.0
        %265 = vmatprep.subr.mxu0 0.0
        %266 = vmatpush1.msra.mxu0 0.0
        %267 = vmatprep.subr.mxu0 0.0
        %268 = vmatpush1.msra.mxu0 0.0
        %v269 = vand.u32 %v233, 4294901760
        %270 = vmatprep.subr.mxu0 %v269
        %v271 = vand.u32 %v232, 4294901760
        %272 = vmatpush1.msra.mxu0 %v271
        %273 = vmatprep.subr.mxu0 0.0
        %274 = vmatpush2.msra.mxu0 0.0
        %275 = vmatprep.subr.mxu0 0.0
        %276 = vmatpush2.msra.mxu0 0.0
        %277 = vmatprep.subr.mxu0 0.0
        %278 = vmatpush2.msra.mxu0 0.0
        %279 = vmatprep.subr.mxu0 0.0
        %280 = vmatpush2.msra.mxu0 0.0
        %281 = vmatprep.subr.mxu0 0.0
        %282 = vmatpush2.msra.mxu0 0.0
        %283 = vmatprep.subr.mxu0 0.0
        %284 = vmatpush2.msra.mxu0 0.0
        %285 = vmatprep.subr.mxu0 0.0
        %286 = vmatpush2.msra.mxu0 0.0
        %287 = vmatprep.subr.mxu0 0.0
        %288 = vmatpush2.msra.mxu0 0.0
        %289 = vmatprep.subr.mxu0 0.0
        %290 = vmatpush2.msra.mxu0 0.0
        %291 = vmatprep.subr.mxu0 0.0
        %292 = vmatpush2.msra.mxu0 0.0
        %293 = vmatprep.subr.mxu0 0.0
        %294 = vmatpush2.msra.mxu0 0.0
        %295 = vmatprep.subr.mxu0 0.0
        %296 = vmatpush2.msra.mxu0 0.0
        %297 = vmatprep.subr.mxu0 0.0
        %298 = vmatpush2.msra.mxu0 0.0
        %299 = vmatprep.subr.mxu0 0.0
        %300 = vmatpush2.msra.mxu0 0.0
        %301 = vmatprep.subr.mxu0 0.0
        %302 = vmatpush2.msra.mxu0 0.0
        %303 = vmatprep.subr.mxu0 0.0
        %304 = vmatpush2.msra.mxu0 0.0
        %305 = vmatprep.mubr.f32.mxu0 0.0
        %v306 = vand.u32 %v237, 4294901760
        %v307 = vsub.f32 %v237, %v306
        %v308 = vand.u32 %v307, 4294901760
        %v309 = vsub.f32 %v307, %v308
        %v310 = vand.u32 %v309, 4294901760
        %311 = vmatmul.mubr.f32.gmra.mxu0 %v310
        %v312 = vpop.f32.mrf.mxu0
        %v313 = vadd.f32 0.0, %v312
        %v314 = vpop.f32.mrf.mxu0
        %v315 = vadd.f32 0.0, %v314
        %316 = vdwg.mxu0
        %317 = vmatprep.subr.mxu0 0.0
        %318 = vmatpush1.msra.mxu0 0.0
        %319 = vmatprep.subr.mxu0 0.0
        %320 = vmatpush1.msra.mxu0 0.0
        %321 = vmatprep.subr.mxu0 0.0
        %322 = vmatpush1.msra.mxu0 0.0
        %323 = vmatprep.subr.mxu0 0.0
        %324 = vmatpush1.msra.mxu0 0.0
        %325 = vmatprep.subr.mxu0 0.0
        %326 = vmatpush1.msra.mxu0 0.0
        %327 = vmatprep.subr.mxu0 0.0
        %328 = vmatpush1.msra.mxu0 0.0
        %329 = vmatprep.subr.mxu0 0.0
        %330 = vmatpush1.msra.mxu0 0.0
        %331 = vmatprep.subr.mxu0 0.0
        %332 = vmatpush1.msra.mxu0 0.0
        %333 = vmatprep.subr.mxu0 0.0
        %334 = vmatpush1.msra.mxu0 0.0
        %335 = vmatprep.subr.mxu0 0.0
        %336 = vmatpush1.msra.mxu0 0.0
        %337 = vmatprep.subr.mxu0 0.0
        %338 = vmatpush1.msra.mxu0 0.0
        %339 = vmatprep.subr.mxu0 0.0
        %340 = vmatpush1.msra.mxu0 0.0
        %341 = vmatprep.subr.mxu0 0.0
        %342 = vmatpush1.msra.mxu0 0.0
        %343 = vmatprep.subr.mxu0 0.0
        %344 = vmatpush1.msra.mxu0 0.0
        %345 = vmatprep.subr.mxu0 0.0
        %346 = vmatpush1.msra.mxu0 0.0
        %v347 = vand.u32 %v233, 4294901760
        %v348 = vsub.f32 %v233, %v347
        %v349 = vand.u32 %v348, 4294901760
        %v350 = vsub.f32 %v348, %v349
        %v351 = vand.u32 %v350, 4294901760
        %352 = vmatprep.subr.mxu0 %v351
        %v353 = vand.u32 %v232, 4294901760
        %v354 = vsub.f32 %v232, %v353
        %v355 = vand.u32 %v354, 4294901760
        %v356 = vsub.f32 %v354, %v355
        %v357 = vand.u32 %v356, 4294901760
        %358 = vmatpush1.msra.mxu0 %v357
        %359 = vmatprep.subr.mxu0 0.0
        %360 = vmatpush2.msra.mxu0 0.0
        %361 = vmatprep.subr.mxu0 0.0
        %362 = vmatpush2.msra.mxu0 0.0
        %363 = vmatprep.subr.mxu0 0.0
        %364 = vmatpush2.msra.mxu0 0.0
        %365 = vmatprep.subr.mxu0 0.0
        %366 = vmatpush2.msra.mxu0 0.0
        %367 = vmatprep.subr.mxu0 0.0
        %368 = vmatpush2.msra.mxu0 0.0
        %369 = vmatprep.subr.mxu0 0.0
        %370 = vmatpush2.msra.mxu0 0.0
        %371 = vmatprep.subr.mxu0 0.0
        %372 = vmatpush2.msra.mxu0 0.0
        %373 = vmatprep.subr.mxu0 0.0
        %374 = vmatpush2.msra.mxu0 0.0
        %375 = vmatprep.subr.mxu0 0.0
        %376 = vmatpush2.msra.mxu0 0.0
        %377 = vmatprep.subr.mxu0 0.0
        %378 = vmatpush2.msra.mxu0 0.0
        %379 = vmatprep.subr.mxu0 0.0
        %380 = vmatpush2.msra.mxu0 0.0
        %381 = vmatprep.subr.mxu0 0.0
        %382 = vmatpush2.msra.mxu0 0.0
        %383 = vmatprep.subr.mxu0 0.0
        %384 = vmatpush2.msra.mxu0 0.0
        %385 = vmatprep.subr.mxu0 0.0
        %386 = vmatpush2.msra.mxu0 0.0
        %387 = vmatprep.subr.mxu0 0.0
        %388 = vmatpush2.msra.mxu0 0.0
        %389 = vmatprep.subr.mxu0 0.0
        %390 = vmatpush2.msra.mxu0 0.0
        %391 = vmatprep.mubr.f32.mxu0 0.0
        %v392 = vand.u32 %v237, 4294901760
        %393 = vmatmul.mubr.f32.gmra.mxu0 %v392
        %v394 = vpop.f32.mrf.mxu0
        %v395 = vadd.f32 %v313, %v394
        %v396 = vpop.f32.mrf.mxu0
        %v397 = vadd.f32 %v315, %v396
        %398 = vdwg.mxu0
        %399 = vmatprep.subr.mxu0 0.0
        %400 = vmatpush1.msra.mxu0 0.0
        %401 = vmatprep.subr.mxu0 0.0
        %402 = vmatpush1.msra.mxu0 0.0
        %403 = vmatprep.subr.mxu0 0.0
        %404 = vmatpush1.msra.mxu0 0.0
        %405 = vmatprep.subr.mxu0 0.0
        %406 = vmatpush1.msra.mxu0 0.0
        %407 = vmatprep.subr.mxu0 0.0
        %408 = vmatpush1.msra.mxu0 0.0
        %409 = vmatprep.subr.mxu0 0.0
        %410 = vmatpush1.msra.mxu0 0.0
        %411 = vmatprep.subr.mxu0 0.0
        %412 = vmatpush1.msra.mxu0 0.0
        %413 = vmatprep.subr.mxu0 0.0
        %414 = vmatpush1.msra.mxu0 0.0
        %415 = vmatprep.subr.mxu0 0.0
        %416 = vmatpush1.msra.mxu0 0.0
        %417 = vmatprep.subr.mxu0 0.0
        %418 = vmatpush1.msra.mxu0 0.0
        %419 = vmatprep.subr.mxu0 0.0
        %420 = vmatpush1.msra.mxu0 0.0
        %421 = vmatprep.subr.mxu0 0.0
        %422 = vmatpush1.msra.mxu0 0.0
        %423 = vmatprep.subr.mxu0 0.0
        %424 = vmatpush1.msra.mxu0 0.0
        %425 = vmatprep.subr.mxu0 0.0
        %426 = vmatpush1.msra.mxu0 0.0
        %427 = vmatprep.subr.mxu0 0.0
        %428 = vmatpush1.msra.mxu0 0.0
        %v429 = vand.u32 %v233, 4294901760
        %v430 = vsub.f32 %v233, %v429
        %431 = vmatprep.subr.mxu0 %v430
        %v432 = vand.u32 %v232, 4294901760
        %v433 = vsub.f32 %v232, %v432
        %434 = vmatpush1.msra.mxu0 %v433
        %435 = vmatprep.subr.mxu0 0.0
        %436 = vmatpush2.msra.mxu0 0.0
        %437 = vmatprep.subr.mxu0 0.0
        %438 = vmatpush2.msra.mxu0 0.0
        %439 = vmatprep.subr.mxu0 0.0
        %440 = vmatpush2.msra.mxu0 0.0
        %441 = vmatprep.subr.mxu0 0.0
        %442 = vmatpush2.msra.mxu0 0.0
        %443 = vmatprep.subr.mxu0 0.0
        %444 = vmatpush2.msra.mxu0 0.0
        %445 = vmatprep.subr.mxu0 0.0
        %446 = vmatpush2.msra.mxu0 0.0
        %447 = vmatprep.subr.mxu0 0.0
        %448 = vmatpush2.msra.mxu0 0.0
        %449 = vmatprep.subr.mxu0 0.0
        %450 = vmatpush2.msra.mxu0 0.0
        %451 = vmatprep.subr.mxu0 0.0
        %452 = vmatpush2.msra.mxu0 0.0
        %453 = vmatprep.subr.mxu0 0.0
        %454 = vmatpush2.msra.mxu0 0.0
        %455 = vmatprep.subr.mxu0 0.0
        %456 = vmatpush2.msra.mxu0 0.0
        %457 = vmatprep.subr.mxu0 0.0
        %458 = vmatpush2.msra.mxu0 0.0
        %459 = vmatprep.subr.mxu0 0.0
        %460 = vmatpush2.msra.mxu0 0.0
        %461 = vmatprep.subr.mxu0 0.0
        %462 = vmatpush2.msra.mxu0 0.0
        %463 = vmatprep.subr.mxu0 0.0
        %464 = vmatpush2.msra.mxu0 0.0
        %465 = vmatprep.subr.mxu0 0.0
        %466 = vmatpush2.msra.mxu0 0.0
        %467 = vmatprep.mubr.f32.mxu0 0.0
        %v468 = vand.u32 %v237, 4294901760
        %v469 = vsub.f32 %v237, %v468
        %470 = vmatmul.mubr.f32.gmra.mxu0 %v469
        %v471 = vpop.f32.mrf.mxu0
        %v472 = vadd.f32 %v395, %v471
        %v473 = vpop.f32.mrf.mxu0
        %v474 = vadd.f32 %v397, %v473
        %475 = vdwg.mxu0
        %476 = vmatprep.subr.mxu0 0.0
        %477 = vmatpush1.msra.mxu0 0.0
        %478 = vmatprep.subr.mxu0 0.0
        %479 = vmatpush1.msra.mxu0 0.0
        %480 = vmatprep.subr.mxu0 0.0
        %481 = vmatpush1.msra.mxu0 0.0
        %482 = vmatprep.subr.mxu0 0.0
        %483 = vmatpush1.msra.mxu0 0.0
        %484 = vmatprep.subr.mxu0 0.0
        %485 = vmatpush1.msra.mxu0 0.0
        %486 = vmatprep.subr.mxu0 0.0
        %487 = vmatpush1.msra.mxu0 0.0
        %488 = vmatprep.subr.mxu0 0.0
        %489 = vmatpush1.msra.mxu0 0.0
        %490 = vmatprep.subr.mxu0 0.0
        %491 = vmatpush1.msra.mxu0 0.0
        %492 = vmatprep.subr.mxu0 0.0
        %493 = vmatpush1.msra.mxu0 0.0
        %494 = vmatprep.subr.mxu0 0.0
        %495 = vmatpush1.msra.mxu0 0.0
        %496 = vmatprep.subr.mxu0 0.0
        %497 = vmatpush1.msra.mxu0 0.0
        %498 = vmatprep.subr.mxu0 0.0
        %499 = vmatpush1.msra.mxu0 0.0
        %500 = vmatprep.subr.mxu0 0.0
        %501 = vmatpush1.msra.mxu0 0.0
        %502 = vmatprep.subr.mxu0 0.0
        %503 = vmatpush1.msra.mxu0 0.0
        %504 = vmatprep.subr.mxu0 0.0
        %505 = vmatpush1.msra.mxu0 0.0
        %v506 = vand.u32 %v233, 4294901760
        %507 = vmatprep.subr.mxu0 %v506
        %v508 = vand.u32 %v232, 4294901760
        %509 = vmatpush1.msra.mxu0 %v508
        %510 = vmatprep.subr.mxu0 0.0
        %511 = vmatpush2.msra.mxu0 0.0
        %512 = vmatprep.subr.mxu0 0.0
        %513 = vmatpush2.msra.mxu0 0.0
        %514 = vmatprep.subr.mxu0 0.0
        %515 = vmatpush2.msra.mxu0 0.0
        %516 = vmatprep.subr.mxu0 0.0
        %517 = vmatpush2.msra.mxu0 0.0
        %518 = vmatprep.subr.mxu0 0.0
        %519 = vmatpush2.msra.mxu0 0.0
        %520 = vmatprep.subr.mxu0 0.0
        %521 = vmatpush2.msra.mxu0 0.0
        %522 = vmatprep.subr.mxu0 0.0
        %523 = vmatpush2.msra.mxu0 0.0
        %524 = vmatprep.subr.mxu0 0.0
        %525 = vmatpush2.msra.mxu0 0.0
        %526 = vmatprep.subr.mxu0 0.0
        %527 = vmatpush2.msra.mxu0 0.0
        %528 = vmatprep.subr.mxu0 0.0
        %529 = vmatpush2.msra.mxu0 0.0
        %530 = vmatprep.subr.mxu0 0.0
        %531 = vmatpush2.msra.mxu0 0.0
        %532 = vmatprep.subr.mxu0 0.0
        %533 = vmatpush2.msra.mxu0 0.0
        %534 = vmatprep.subr.mxu0 0.0
        %535 = vmatpush2.msra.mxu0 0.0
        %536 = vmatprep.subr.mxu0 0.0
        %537 = vmatpush2.msra.mxu0 0.0
        %538 = vmatprep.subr.mxu0 0.0
        %539 = vmatpush2.msra.mxu0 0.0
        %540 = vmatprep.subr.mxu0 0.0
        %541 = vmatpush2.msra.mxu0 0.0
        %542 = vmatprep.mubr.f32.mxu0 0.0
        %v543 = vand.u32 %v237, 4294901760
        %v544 = vsub.f32 %v237, %v543
        %v545 = vand.u32 %v544, 4294901760
        %546 = vmatmul.mubr.f32.gmra.mxu0 %v545
        %v547 = vpop.f32.mrf.mxu0
        %v548 = vadd.f32 %v472, %v547
        %v549 = vpop.f32.mrf.mxu0
        %v550 = vadd.f32 %v474, %v549
        %551 = vdwg.mxu0
        %552 = vmatprep.subr.mxu0 0.0
        %553 = vmatpush1.msra.mxu0 0.0
        %554 = vmatprep.subr.mxu0 0.0
        %555 = vmatpush1.msra.mxu0 0.0
        %556 = vmatprep.subr.mxu0 0.0
        %557 = vmatpush1.msra.mxu0 0.0
        %558 = vmatprep.subr.mxu0 0.0
        %559 = vmatpush1.msra.mxu0 0.0
        %560 = vmatprep.subr.mxu0 0.0
        %561 = vmatpush1.msra.mxu0 0.0
        %562 = vmatprep.subr.mxu0 0.0
        %563 = vmatpush1.msra.mxu0 0.0
        %564 = vmatprep.subr.mxu0 0.0
        %565 = vmatpush1.msra.mxu0 0.0
        %566 = vmatprep.subr.mxu0 0.0
        %567 = vmatpush1.msra.mxu0 0.0
        %568 = vmatprep.subr.mxu0 0.0
        %569 = vmatpush1.msra.mxu0 0.0
        %570 = vmatprep.subr.mxu0 0.0
        %571 = vmatpush1.msra.mxu0 0.0
        %572 = vmatprep.subr.mxu0 0.0
        %573 = vmatpush1.msra.mxu0 0.0
        %574 = vmatprep.subr.mxu0 0.0
        %575 = vmatpush1.msra.mxu0 0.0
        %576 = vmatprep.subr.mxu0 0.0
        %577 = vmatpush1.msra.mxu0 0.0
        %578 = vmatprep.subr.mxu0 0.0
        %579 = vmatpush1.msra.mxu0 0.0
        %580 = vmatprep.subr.mxu0 0.0
        %581 = vmatpush1.msra.mxu0 0.0
        %v582 = vand.u32 %v233, 4294901760
        %v583 = vsub.f32 %v233, %v582
        %v584 = vand.u32 %v583, 4294901760
        %585 = vmatprep.subr.mxu0 %v584
        %v586 = vand.u32 %v232, 4294901760
        %v587 = vsub.f32 %v232, %v586
        %v588 = vand.u32 %v587, 4294901760
        %589 = vmatpush1.msra.mxu0 %v588
        %590 = vmatprep.subr.mxu0 0.0
        %591 = vmatpush2.msra.mxu0 0.0
        %592 = vmatprep.subr.mxu0 0.0
        %593 = vmatpush2.msra.mxu0 0.0
        %594 = vmatprep.subr.mxu0 0.0
        %595 = vmatpush2.msra.mxu0 0.0
        %596 = vmatprep.subr.mxu0 0.0
        %597 = vmatpush2.msra.mxu0 0.0
        %598 = vmatprep.subr.mxu0 0.0
        %599 = vmatpush2.msra.mxu0 0.0
        %600 = vmatprep.subr.mxu0 0.0
        %601 = vmatpush2.msra.mxu0 0.0
        %602 = vmatprep.subr.mxu0 0.0
        %603 = vmatpush2.msra.mxu0 0.0
        %604 = vmatprep.subr.mxu0 0.0
        %605 = vmatpush2.msra.mxu0 0.0
        %606 = vmatprep.subr.mxu0 0.0
        %607 = vmatpush2.msra.mxu0 0.0
        %608 = vmatprep.subr.mxu0 0.0
        %609 = vmatpush2.msra.mxu0 0.0
        %610 = vmatprep.subr.mxu0 0.0
        %611 = vmatpush2.msra.mxu0 0.0
        %612 = vmatprep.subr.mxu0 0.0
        %613 = vmatpush2.msra.mxu0 0.0
        %614 = vmatprep.subr.mxu0 0.0
        %615 = vmatpush2.msra.mxu0 0.0
        %616 = vmatprep.subr.mxu0 0.0
        %617 = vmatpush2.msra.mxu0 0.0
        %618 = vmatprep.subr.mxu0 0.0
        %619 = vmatpush2.msra.mxu0 0.0
        %620 = vmatprep.subr.mxu0 0.0
        %621 = vmatpush2.msra.mxu0 0.0
        %622 = vmatprep.mubr.f32.mxu0 0.0
        %v623 = vand.u32 %v237, 4294901760
        %624 = vmatmul.mubr.f32.gmra.mxu0 %v623
        %v625 = vpop.f32.mrf.mxu0
        %v626 = vadd.f32 %v548, %v625
        %v627 = vpop.f32.mrf.mxu0
        %v628 = vadd.f32 %v550, %v627
        %629 = vdwg.mxu0
        %630 = vmatprep.subr.mxu0 0.0
        %631 = vmatpush1.msra.mxu0 0.0
        %632 = vmatprep.subr.mxu0 0.0
        %633 = vmatpush1.msra.mxu0 0.0
        %634 = vmatprep.subr.mxu0 0.0
        %635 = vmatpush1.msra.mxu0 0.0
        %636 = vmatprep.subr.mxu0 0.0
        %637 = vmatpush1.msra.mxu0 0.0
        %638 = vmatprep.subr.mxu0 0.0
        %639 = vmatpush1.msra.mxu0 0.0
        %640 = vmatprep.subr.mxu0 0.0
        %641 = vmatpush1.msra.mxu0 0.0
        %642 = vmatprep.subr.mxu0 0.0
        %643 = vmatpush1.msra.mxu0 0.0
        %644 = vmatprep.subr.mxu0 0.0
        %645 = vmatpush1.msra.mxu0 0.0
        %646 = vmatprep.subr.mxu0 0.0
        %647 = vmatpush1.msra.mxu0 0.0
        %648 = vmatprep.subr.mxu0 0.0
        %649 = vmatpush1.msra.mxu0 0.0
        %650 = vmatprep.subr.mxu0 0.0
        %651 = vmatpush1.msra.mxu0 0.0
        %652 = vmatprep.subr.mxu0 0.0
        %653 = vmatpush1.msra.mxu0 0.0
        %654 = vmatprep.subr.mxu0 0.0
        %655 = vmatpush1.msra.mxu0 0.0
        %656 = vmatprep.subr.mxu0 0.0
        %657 = vmatpush1.msra.mxu0 0.0
        %658 = vmatprep.subr.mxu0 0.0
        %659 = vmatpush1.msra.mxu0 0.0
        %v660 = vand.u32 %v233, 4294901760
        %661 = vmatprep.subr.mxu0 %v660
        %v662 = vand.u32 %v232, 4294901760
        %663 = vmatpush1.msra.mxu0 %v662
        %664 = vmatprep.subr.mxu0 0.0
        %665 = vmatpush2.msra.mxu0 0.0
        %666 = vmatprep.subr.mxu0 0.0
        %667 = vmatpush2.msra.mxu0 0.0
        %668 = vmatprep.subr.mxu0 0.0
        %669 = vmatpush2.msra.mxu0 0.0
        %670 = vmatprep.subr.mxu0 0.0
        %671 = vmatpush2.msra.mxu0 0.0
        %672 = vmatprep.subr.mxu0 0.0
        %673 = vmatpush2.msra.mxu0 0.0
        %674 = vmatprep.subr.mxu0 0.0
        %675 = vmatpush2.msra.mxu0 0.0
        %676 = vmatprep.subr.mxu0 0.0
        %677 = vmatpush2.msra.mxu0 0.0
        %678 = vmatprep.subr.mxu0 0.0
        %679 = vmatpush2.msra.mxu0 0.0
        %680 = vmatprep.subr.mxu0 0.0
        %681 = vmatpush2.msra.mxu0 0.0
        %682 = vmatprep.subr.mxu0 0.0
        %683 = vmatpush2.msra.mxu0 0.0
        %684 = vmatprep.subr.mxu0 0.0
        %685 = vmatpush2.msra.mxu0 0.0
        %686 = vmatprep.subr.mxu0 0.0
        %687 = vmatpush2.msra.mxu0 0.0
        %688 = vmatprep.subr.mxu0 0.0
        %689 = vmatpush2.msra.mxu0 0.0
        %690 = vmatprep.subr.mxu0 0.0
        %691 = vmatpush2.msra.mxu0 0.0
        %692 = vmatprep.subr.mxu0 0.0
        %693 = vmatpush2.msra.mxu0 0.0
        %694 = vmatprep.subr.mxu0 0.0
        %695 = vmatpush2.msra.mxu0 0.0
        %696 = vmatprep.mubr.f32.mxu0 0.0
        %v697 = vand.u32 %v237, 4294901760
        %698 = vmatmul.mubr.f32.gmra.mxu0 %v697
        %v699 = vpop.f32.mrf.mxu0
        %v700 = vadd.f32 %v626, %v699
        %v701 = vpop.f32.mrf.mxu0
        %v702 = vadd.f32 %v628, %v701
        %703 = vdwg.mxu0
        %v706 = vcombine.low %v700, %v702
        %708 = vst [vmem:[%s206] sm:$0xff] %v706
        %s709 = sand.u32 %s105, 1
        %s710 = scalar_lea.sflag [#allocation7], %s709
        %s711 = sand.u32 %s105, 1
        %s712 = smul.addr %s711, 8
        %s713 = scalar_lea.vmem [#allocation8], %s712
        // Predicated region
        $region33: #{tpu_custom_call.1} parent=27 // pred_check
          %p714 = pneg %p115
        $region34: #{tpu_custom_call.1} parent=27 // pred_check_branch
          %716 = sbr.rel (%p714) target = $region36
        $region35: #{tpu_custom_call.1} parent=27 // pred_region
          %s717 = smul.u32 2, %s34
          %s719 = ssub.s32 128, 128
          %720 = vsyncadd %s710, %s719
          %s721 = smul.addr %s33, 2
          %s722 = sadd.s32 %s717, %s721
          %s723 = smul.addr %s722, 64
          %s724 = scalar_lea.hbm %s4, %s723
          %s726 = sshll.u32 %s713, 4
          %s727 = int_to_ptr.vmem [resolvable:$true] %s726
          %729 = dma.vmem_to_hbm [thread:$0]  %s727, 128, %s724, %s710
        $region36: #{tpu_custom_call.1} parent=27 // pred_fallthru
          _
      $region28: #{tpu_custom_call.1} parent=5 // pred_fallthru
        _
      %p730 = scmp.le.s32.totalorder 2, %s24
      // Predicated region
      $region37: #{tpu_custom_call.1} parent=5 // pred_check
        %p731 = pneg %p730
      $region38: #{tpu_custom_call.1} parent=5 // pred_check_branch
        %733 = sbr.rel (%p731) target = $region40
      $region39: #{tpu_custom_call.1} parent=5 // pred_region
        %s734 = ssub.s32 %s24, 2
        // Predicated region
        $region41: #{tpu_custom_call.1} parent=39 // pred_check
          %p735 = pneg %p121
        $region42: #{tpu_custom_call.1} parent=39 // pred_check_branch
          %737 = sbr.rel (%p735) target = $region44
        $region43: #{tpu_custom_call.1} parent=39 // pred_region
          %s738 = sand.u32 %s106, 1
          %s739 = scalar_lea.sflag [#allocation7], %s738
          %s740 = sand.u32 %s106, 1
          %s741 = smul.addr %s740, 8
          %s742 = scalar_lea.vmem [#allocation8], %s741
          %743 = dma.done %s739, 128
        $region44: #{tpu_custom_call.1} parent=39 // pred_fallthru
          _
      $region40: #{tpu_custom_call.1} parent=5 // pred_fallthru
        _
    $region6: #{tpu_custom_call.1} parent=1 // loop_footer
      %s28 = sadd.s32 1, %s24
    $region7: #{tpu_custom_call.1} parent=1 // loop_footer_branch
      %23 = sbr.rel target = $region3
    $region8: #{tpu_custom_call.1} parent=1 // loop_exit
      _
    %744 = vsyncpa [#allocation6], 1
    %s745 = scalar_lea.sflag [#allocation6], 1
    %746 = vsyncpa %s745, 1
    %747 = vsyncpa [#allocation7], 1
    %s748 = scalar_lea.sflag [#allocation7], 1
    %749 = vsyncpa %s748, 1

</llo_original>
